<compile_context>
chip_gen: v7x
topology: tpu7x:2x2x1
jax: 0.10.0
libtpu: 0.0.40
codegen_flags: <defaults>
</compile_context>

<pallas_src>
import math
import functools

import jax
import jax.numpy as jnp
from jax.experimental import pallas as pl
from jax.experimental.pallas import tpu as pltpu


_VMEM_LIMIT = 32 * 1024 * 1024          # explicit scoped-VMEM budget (safe on v5e/v6e/v7x)
_GN_FUSED_SLAB_BYTES = 4 * 1024 * 1024  # per-sample (HW, C) f32 slab budget for fused GN


def _round_up(x, m):
    return (x + m - 1) // m * m


# ----------------------------------------------------------------------------
# Pallas kernel 1: grouped GEMM with bias folded into the accumulator init
# ----------------------------------------------------------------------------

def _gemm_bias_kernel(a_ref, w_ref, bias_ref, o_ref, acc_ref):
    """out[g] = a[g] @ w[g] + bias[g]; bf16 operands, f32 accumulation."""
    @pl.when(pl.program_id(3) == 0)
    def _():
        acc_ref[...] = jnp.broadcast_to(bias_ref[0], acc_ref.shape)

    acc_ref[...] += jnp.dot(a_ref[0], w_ref[0],
                            preferred_element_type=jnp.float32)

    @pl.when(pl.program_id(3) == pl.num_programs(3) - 1)
    def _():
        o_ref[0] = acc_ref[...].astype(o_ref.dtype)


@jax.jit
def matmul_bias(a, w, bias):
    """Grouped GEMM: a (G, M, K), w (G, K, N) bf16, bias (G, N) f32 -> (G, M, N) f32."""
    G, M, K = a.shape
    _, _, N = w.shape

    Mp8 = _round_up(M, 8)
    tm = Mp8 if Mp8 <= 256 else 256
    Mp = _round_up(M, tm)
    Np = _round_up(N, 128)
    Kp = _round_up(K, 128)
    tn = next(t for t in (512, 256, 128) if Np % t == 0)
    tk = next(t for t in (512, 256, 128) if Kp % t == 0)
    # v7x megacore: give the two TensorCores >=2 parallel tiles when N allows it.
    if G * (Mp // tm) * (Np // tn) == 1 and tn >= 256:
        tn //= 2

    a_p = jnp.pad(a.astype(jnp.bfloat16), ((0, 0), (0, Mp - M), (0, Kp - K)))
    w_p = jnp.pad(w.astype(jnp.bfloat16), ((0, 0), (0, Kp - K), (0, Np - N)))
    bias_p = jnp.pad(bias.astype(jnp.float32), ((0, 0), (0, Np - N)))[:, None, :]

    out = pl.pallas_call(
        _gemm_bias_kernel,
        out_shape=jax.ShapeDtypeStruct((G, Mp, Np), jnp.float32),
        grid_spec=pltpu.PrefetchScalarGridSpec(
            num_scalar_prefetch=0,
            grid=(G, Mp // tm, Np // tn, Kp // tk),
            in_specs=[
                pl.BlockSpec((1, tm, tk), lambda g, i, j, k: (g, i, k)),
                pl.BlockSpec((1, tk, tn), lambda g, i, j, k: (g, k, j)),
                pl.BlockSpec((1, 1, tn), lambda g, i, j, k: (g, 0, j)),
            ],
            out_specs=pl.BlockSpec((1, tm, tn), lambda g, i, j, k: (g, i, j)),
            scratch_shapes=[pltpu.VMEM((tm, tn), jnp.float32)],
        ),
        compiler_params=pltpu.CompilerParams(
            dimension_semantics=("parallel", "parallel", "parallel", "arbitrary"),
            vmem_limit_bytes=_VMEM_LIMIT),
    )(a_p, w_p, bias_p)
    return out[:, :M, :N]


# ----------------------------------------------------------------------------
# Pallas kernel 2: fused GroupNorm(16) + ELU (optional fused residual add)
# ----------------------------------------------------------------------------

def _gn_elu_body(x, r, gamma_ref, beta_ref, gmap_ref, o_ref):
    if r is not None:
        x = x + r                                   # fused residual add (f32)
    gmap = gmap_ref[...]                            # (C, G16) one-hot channel->group
    hw, c = x.shape
    g = gmap.shape[1]
    cnt = float(hw * (c // g))

    ch_sum = jnp.sum(x, axis=0, keepdims=True)                          # (1, C)
    ch_sq = jnp.sum(x * x, axis=0, keepdims=True)                       # (1, C)
    g_sum = jnp.dot(ch_sum, gmap, preferred_element_type=jnp.float32)   # (1, G16)
    g_sq = jnp.dot(ch_sq, gmap, preferred_element_type=jnp.float32)     # (1, G16)

    mean_g = g_sum / cnt
    var_g = g_sq / cnt - mean_g * mean_g
    inv_g = jax.lax.rsqrt(jnp.maximum(var_g, 0.0) + 1e-5)               # keep f32 (v5e EUP)

    dn = (((1,), (1,)), ((), ()))                    # broadcast group stats back to channels
    mean_c = jax.lax.dot_general(mean_g, gmap, dn, preferred_element_type=jnp.float32)
    inv_c = jax.lax.dot_general(inv_g, gmap, dn, preferred_element_type=jnp.float32)

    y = (x - mean_c) * inv_c * gamma_ref[0] + beta_ref[0]
    o_ref[0] = jnp.where(y > 0, y, jnp.exp(jnp.minimum(y, 0.0)) - 1.0)   # ELU(alpha=1)


def _gn_elu_kernel(x_ref, gamma_ref, beta_ref, gmap_ref, o_ref):
    _gn_elu_body(x_ref[0], None, gamma_ref, beta_ref, gmap_ref, o_ref)


def _gn_elu_res_kernel(x_ref, r_ref, gamma_ref, beta_ref, gmap_ref, o_ref):
    _gn_elu_body(x_ref[0], r_ref[0], gamma_ref, beta_ref, gmap_ref, o_ref)


def _gn_elu_fused_call(x2, res2, gamma, beta, groups):
    GB, HW, C = x2.shape
    G = gamma.shape[0]
    B = GB // G
    gmap = jnp.repeat(jnp.eye(groups, dtype=jnp.float32), C // groups, axis=0)
    gamma3 = gamma.reshape(G, 1, C)
    beta3 = beta.reshape(G, 1, C)

    specs = [pl.BlockSpec((1, HW, C), lambda n: (n, 0, 0))]
    args = [x2]
    if res2 is not None:
        specs.append(pl.BlockSpec((1, HW, C), lambda n: (n, 0, 0)))
        args.append(res2)
    specs += [pl.BlockSpec((1, 1, C), lambda n: (n // B, 0, 0)),
              pl.BlockSpec((1, 1, C), lambda n: (n // B, 0, 0)),
              pl.BlockSpec((C, groups), lambda n: (0, 0))]
    args += [gamma3, beta3, gmap]
    kern = _gn_elu_kernel if res2 is None else _gn_elu_res_kernel

    return pl.pallas_call(
        kern,
        out_shape=jax.ShapeDtypeStruct((GB, HW, C), jnp.float32),
        grid_spec=pltpu.PrefetchScalarGridSpec(
            num_scalar_prefetch=0,
            grid=(GB,),
            in_specs=specs,
            out_specs=pl.BlockSpec((1, HW, C), lambda n: (n, 0, 0)),
        ),
        compiler_params=pltpu.CompilerParams(
            dimension_semantics=("parallel",),
            vmem_limit_bytes=_VMEM_LIMIT),
    )(*args)


def _affine_elu_kernel(x_ref, scale_ref, shift_ref, o_ref):
    y = x_ref[0] * scale_ref[0] + shift_ref[0]
    o_ref[0] = jnp.where(y > 0, y, jnp.exp(jnp.minimum(y, 0.0)) - 1.0)


def _gn_elu_tiled_call(x2, gamma, beta, groups):
    """Bounded-VMEM GN path (v7x-safe at large resolutions): XLA stats + tiled affine/ELU."""
    GB, HW, C = x2.shape
    G = gamma.shape[0]
    B = GB // G
    cg = C // groups

    xg = x2.reshape(GB, HW, groups, cg)
    mean = jnp.mean(xg, axis=(1, 3))                                    # (GB, 16)
    var = jnp.var(xg, axis=(1, 3))
    inv = jax.lax.rsqrt(var + 1e-5)
    mean_c = jnp.repeat(mean, cg, axis=1)                               # (GB, C)
    inv_c = jnp.repeat(inv, cg, axis=1)
    gamma_gb = jnp.repeat(gamma, B, axis=0)
    beta_gb = jnp.repeat(beta, B, axis=0)
    scale = (inv_c * gamma_gb)[:, None, :]                              # (GB, 1, C)
    shift = (beta_gb - mean_c * inv_c * gamma_gb)[:, None, :]

    thw = max(8, min(_round_up(HW, 8), ((1 << 20) // (4 * C)) // 8 * 8))
    HWp = _round_up(HW, thw)
    xp = jnp.pad(x2, ((0, 0), (0, HWp - HW), (0, 0)))

    out = pl.pallas_call(
        _affine_elu_kernel,
        out_shape=jax.ShapeDtypeStruct((GB, HWp, C), jnp.float32),
        grid_spec=pltpu.PrefetchScalarGridSpec(
            num_scalar_prefetch=0,
            grid=(GB, HWp // thw),
            in_specs=[pl.BlockSpec((1, thw, C), lambda n, t: (n, t, 0)),
                      pl.BlockSpec((1, 1, C), lambda n, t: (n, 0, 0)),
                      pl.BlockSpec((1, 1, C), lambda n, t: (n, 0, 0))],
            out_specs=pl.BlockSpec((1, thw, C), lambda n, t: (n, t, 0)),
        ),
        compiler_params=pltpu.CompilerParams(
            dimension_semantics=("parallel", "parallel"),
            vmem_limit_bytes=_VMEM_LIMIT),
    )(xp, scale, shift)
    return out[:, :HW, :]


@functools.partial(jax.jit, static_argnames=("groups",))
def groupnorm_elu(x, gamma, beta, residual=None, groups=16):
    """GroupNorm(groups, eps=1e-5, affine) + ELU on (G, B, H, W, C); optionally GN(x + residual)."""
    G, B, H, W, C = x.shape
    x2 = x.reshape(G * B, H * W, C).astype(jnp.float32)
    r2 = None if residual is None else residual.reshape(G * B, H * W, C).astype(jnp.float32)
    if H * W * C * 4 <= _GN_FUSED_SLAB_BYTES:
        out = _gn_elu_fused_call(x2, r2, gamma, beta, groups)
    else:
        if r2 is not None:
            x2 = x2 + r2
        out = _gn_elu_tiled_call(x2, gamma, beta, groups)
    return out.reshape(G, B, H, W, C)


# ----------------------------------------------------------------------------
# Conv lowering (bf16 im2col glue + Pallas grouped GEMM) and VPU MAC layers
# ----------------------------------------------------------------------------

def _im2col(x, k):
    """x: (G, B, H, W, C) -> (G, B*H*W, k*k*C) bf16 patches (tap-major, then C)."""
    G, B, H, W, C = x.shape
    xb = x.astype(jnp.bfloat16)
    if k == 1:
        return xb.reshape(G, B * H * W, C)
    p = k // 2
    xp = jnp.pad(xb, ((0, 0), (0, 0), (p, p), (p, p), (0, 0)))
    cols = [xp[:, :, i:i + H, j:j + W, :] for i in range(k) for j in range(k)]
    patches = jnp.concatenate(cols, axis=-1)
    return patches.reshape(G, B * H * W, k * k * C)


@jax.jit
def conv2d_raw(x, w, b):
    """'same' conv, stride 1.  x: (G,B,H,W,C); w: (G, k*k*C, N) bf16; b: (G, N) f32."""
    G, B, H, W, C = x.shape
    K, N = w.shape[1], w.shape[2]
    k = int(round(math.sqrt(K // C)))
    patches = _im2col(x, k)
    y = matmul_bias(patches, w, b)
    return y.reshape(G, B, H, W, N)


@jax.jit
def conv3d_fold(x, w, b):
    """nn.Conv3d(1, dout, 3, pad 1) over (channel-as-depth, H, W) + PackNet fold.
    27-tap VPU MAC (no padded micro-GEMM).  x: (G,B,H,W,D); w: (G,dout,3,3,3); b: (G,dout)
    -> (G,B,H,W,dout*D), channel index = dout_idx * D + depth_idx (torch view order)."""
    G, B, H, W, D = x.shape
    dout = w.shape[1]
    xp = jnp.pad(x, ((0, 0), (0, 0), (1, 1), (1, 1), (1, 1)))
    acc = jnp.zeros((G, B, H, W, dout, D), jnp.float32)
    for a in range(3):
        for i in range(3):
            for j in range(3):
                sh = xp[:, :, i:i + H, j:j + W, a:a + D]
                wt = w[:, :, a, i, j]
                acc = acc + sh[:, :, :, :, None, :] * wt[:, None, None, None, :, None]
    acc = acc + b[:, None, None, None, :, None]
    return acc.reshape(G, B, H, W, dout * D)


@jax.jit
def invdepth(x, w, b):
    """InvDepth head: pad1 + 3x3 conv to O channels + sigmoid / 0.5, as a 9-tap VPU MAC.
    x: (G,B,H,W,C); w: (G,3,3,C,O); b: (G,O)."""
    G, B, H, W, C = x.shape
    O = w.shape[-1]
    xp = jnp.pad(x, ((0, 0), (0, 0), (1, 1), (1, 1), (0, 0)))
    y = jnp.zeros((G, B, H, W, O), jnp.float32)
    for i in range(3):
        for j in range(3):
            y = y + jnp.einsum('gbhwc,gco->gbhwo', xp[:, :, i:i + H, j:j + W, :],
                               w[:, i, j], preferred_element_type=jnp.float32)
    y = y + b[:, None, None, None, :]
    return jax.nn.sigmoid(y) / 0.5                                  # min_depth = 0.5


# ----------------------------------------------------------------------------
# Reshape / resize glue (NHWC with leading group axis)
# ----------------------------------------------------------------------------

def space_to_depth_nhwc(x, r=2):      # torch "packing"
    G, B, H, W, C = x.shape
    x = x.reshape(G, B, H // r, r, W // r, r, C)
    x = x.transpose(0, 1, 2, 4, 6, 3, 5)
    return x.reshape(G, B, H // r, W // r, C * r * r)


def pixel_shuffle_nhwc(x, r=2):       # torch nn.PixelShuffle
    G, B, H, W, Crr = x.shape
    C = Crr // (r * r)
    x = x.reshape(G, B, H, W, C, r, r)
    x = x.transpose(0, 1, 2, 5, 3, 6, 4)
    return x.reshape(G, B, H * r, W * r, C)


def upsample2x_nhwc(x):               # torch nn.Upsample(scale_factor=2, mode='nearest')
    return jnp.repeat(jnp.repeat(x, 2, axis=-3), 2, axis=-2)


# ----------------------------------------------------------------------------
# Parameter construction (xavier-uniform weights, zero biases; bf16 GEMM weights
# pre-transposed to im2col layout at init time)
# ----------------------------------------------------------------------------

class KeyGen:
    def __init__(self, seed=0):
        self.key = jax.random.PRNGKey(seed)

    def __call__(self):
        self.key, sub = jax.random.split(self.key)
        return sub


def _xavier(key, shape, fan_in, fan_out):
    lim = math.sqrt(6.0 / (fan_in + fan_out))
    return jax.random.uniform(key, shape, jnp.float32, -lim, lim)


def init_conv2d(kg, G, cin, cout, k):
    w = _xavier(kg(), (G, k, k, cin, cout), cin * k * k, cout * k * k)
    return {"w": w.reshape(G, k * k * cin, cout).astype(jnp.bfloat16),
            "b": jnp.zeros((G, cout), jnp.float32)}


def init_Conv2D(kg, G, cin, cout, k):
    p = init_conv2d(kg, G, cin, cout, k)
    p["gamma"] = jnp.ones((G, cout), jnp.float32)
    p["beta"] = jnp.zeros((G, cout), jnp.float32)
    return p


def init_conv3d(kg, G, dout):
    return {"w": _xavier(kg(), (G, dout, 3, 3, 3), 27, dout * 27),
            "b": jnp.zeros((G, dout), jnp.float32)}


def init_invdepth(kg, G, cin, cout=1):
    return {"w": _xavier(kg(), (G, 3, 3, cin, cout), cin * 9, cout * 9),
            "b": jnp.zeros((G, cout), jnp.float32)}


def apply_Conv2D(p, x):
    y = conv2d_raw(x, p["w"], p["b"])
    return groupnorm_elu(y, p["gamma"], p["beta"])


def init_pack(kg, G, c, k, d):
    return {"conv3d": init_conv3d(kg, G, d), "conv": init_Conv2D(kg, G, c * 4 * d, c, k)}


def apply_pack(p, x):
    x = space_to_depth_nhwc(x, 2)
    x = conv3d_fold(x, p["conv3d"]["w"], p["conv3d"]["b"])
    return apply_Conv2D(p["conv"], x)


def init_unpack(kg, G, cin, cout, k, d):
    return {"conv": init_Conv2D(kg, G, cin, cout * 4 // d, k), "conv3d": init_conv3d(kg, G, d)}


def apply_unpack(p, x):
    x = apply_Conv2D(p["conv"], x)
    x = conv3d_fold(x, p["conv3d"]["w"], p["conv3d"]["b"])
    return pixel_shuffle_nhwc(x, 2)


def init_resconv(kg, G, cin, cout):
    return {"conv1": init_Conv2D(kg, G, cin, cout, 3),
            "conv2": init_Conv2D(kg, G, cout, cout, 3),
            "conv3": init_conv2d(kg, G, cin, cout, 1),
            "gamma": jnp.ones((G, cout), jnp.float32),
            "beta": jnp.zeros((G, cout), jnp.float32)}


def apply_resconv(p, x):
    y = apply_Conv2D(p["conv1"], x)
    y = apply_Conv2D(p["conv2"], y)
    s = conv2d_raw(x, p["conv3"]["w"], p["conv3"]["b"])        # 1x1 shortcut (no norm)
    return groupnorm_elu(y, p["gamma"], p["beta"], residual=s)  # residual add fused into GN


def init_resblock(kg, G, cin, cout, num_blocks):
    blocks = [init_resconv(kg, G, cin, cout)]
    for _ in range(1, num_blocks):
        blocks.append(init_resconv(kg, G, cout, cout))
    return blocks


def apply_resblock(blocks, x):
    for p in blocks:
        x = apply_resconv(p, x)
    return x


# ----------------------------------------------------------------------------
# Decoder (three decoders batched along a leading group axis G=3) / full network
# ----------------------------------------------------------------------------

def init_decoder(kg, G, version, ni, no, n1, n2, n3, n4, n5,
                 unpack_kernel, iconv_kernel, d, out_channels):
    if version == "A":
        n1o, n1i = n1, n1 + ni + no
        n2o, n2i = n2, n2 + n1 + no
        n3o, n3i = n3, n3 + n2 + no
        n4o, n4i = n4, n4 + n3
        n5o, n5i = n5, n5 + n4
    elif version == "B":
        n1o, n1i = n1, n1 + no
        n2o, n2i = n2, n2 + no
        n3o, n3i = n3 // 2, n3 // 2 + no
        n4o, n4i = n4 // 2, n4 // 2
        n5o, n5i = n5 // 2, n5 // 2
    else:
        raise ValueError("Unknown PackNet version {}".format(version))
    return {
        "unpack5": init_unpack(kg, G, n5, n5o, unpack_kernel[0], d),
        "unpack4": init_unpack(kg, G, n5, n4o, unpack_kernel[1], d),
        "unpack3": init_unpack(kg, G, n4, n3o, unpack_kernel[2], d),
        "unpack2": init_unpack(kg, G, n3, n2o, unpack_kernel[3], d),
        "unpack1": init_unpack(kg, G, n2, n1o, unpack_kernel[4], d),
        "iconv5": init_Conv2D(kg, G, n5i, n5, iconv_kernel[0]),
        "iconv4": init_Conv2D(kg, G, n4i, n4, iconv_kernel[1]),
        "iconv3": init_Conv2D(kg, G, n3i, n3, iconv_kernel[2]),
        "iconv2": init_Conv2D(kg, G, n2i, n2, iconv_kernel[3]),
        "iconv1": init_Conv2D(kg, G, n1i, n1, iconv_kernel[4]),
        "out4": init_invdepth(kg, G, n4, out_channels),
        "out3": init_invdepth(kg, G, n3, out_channels),
        "out2": init_invdepth(kg, G, n2, out_channels),
        "out1": init_invdepth(kg, G, n1, out_channels),
    }


def apply_decoder(p, version, G, x5p, skip1, skip2, skip3, skip4, skip5):
    v = version

    def rep(t):
        return jnp.broadcast_to(t, (G,) + t.shape[1:])

    x5p, skip1, skip2, skip3, skip4, skip5 = map(rep, (x5p, skip1, skip2, skip3, skip4, skip5))

    unpack5 = apply_unpack(p["unpack5"], x5p)
    concat5 = jnp.concatenate([unpack5, skip5], -1) if v == "A" else unpack5 + skip5
    iconv5 = apply_Conv2D(p["iconv5"], concat5)

    unpack4 = apply_unpack(p["unpack4"], iconv5)
    concat4 = jnp.concatenate([unpack4, skip4], -1) if v == "A" else unpack4 + skip4
    iconv4 = apply_Conv2D(p["iconv4"], concat4)
    out4 = invdepth(iconv4, p["out4"]["w"], p["out4"]["b"])
    uout4 = upsample2x_nhwc(out4)

    unpack3 = apply_unpack(p["unpack3"], iconv4)
    concat3 = (jnp.concatenate([unpack3, skip3, uout4], -1) if v == "A"
               else jnp.concatenate([unpack3 + skip3, uout4], -1))
    iconv3 = apply_Conv2D(p["iconv3"], concat3)
    out3 = invdepth(iconv3, p["out3"]["w"], p["out3"]["b"])
    uout3 = upsample2x_nhwc(out3)

    unpack2 = apply_unpack(p["unpack2"], iconv3)
    concat2 = (jnp.concatenate([unpack2, skip2, uout3], -1) if v == "A"
               else jnp.concatenate([unpack2 + skip2, uout3], -1))
    iconv2 = apply_Conv2D(p["iconv2"], concat2)
    out2 = invdepth(iconv2, p["out2"]["w"], p["out2"]["b"])
    uout2 = upsample2x_nhwc(out2)

    unpack1 = apply_unpack(p["unpack1"], iconv2)
    concat1 = (jnp.concatenate([unpack1, skip1, uout2], -1) if v == "A"
               else jnp.concatenate([unpack1 + skip1, uout2], -1))
    iconv1 = apply_Conv2D(p["iconv1"], concat1)
    out1 = invdepth(iconv1, p["out1"]["w"], p["out1"]["b"])

    return [out1, out2, out3, out4]


def init_packnet(kg, version="1A", cycle_loss=False):
    ver = version[1:]
    name = "depth" if cycle_loss else "disp"
    in_channels, out_channels = 3, 1
    ni, no = 32, out_channels
    n1, n2, n3, n4, n5 = 32, 64, 128, 256, 512
    num_blocks = [2, 2, 3, 3]
    pack_kernel = [5, 3, 3, 3, 3]
    unpack_kernel = [3, 3, 3, 3, 3]
    iconv_kernel = [3, 3, 3, 3, 3]
    d = 4

    params = {
        "pre_calc": init_Conv2D(kg, 1, in_channels, ni, 5),
        "pack1": init_pack(kg, 1, n1, pack_kernel[0], d),
        "pack2": init_pack(kg, 1, n2, pack_kernel[1], d),
        "pack3": init_pack(kg, 1, n3, pack_kernel[2], d),
        "pack4": init_pack(kg, 1, n4, pack_kernel[3], d),
        "pack5": init_pack(kg, 1, n5, pack_kernel[4], d),
        "conv1": init_Conv2D(kg, 1, ni, n1, 7),
        "conv2": init_resblock(kg, 1, n1, n2, num_blocks[0]),
        "conv3": init_resblock(kg, 1, n2, n3, num_blocks[1]),
        "conv4": init_resblock(kg, 1, n3, n4, num_blocks[2]),
        "conv5": init_resblock(kg, 1, n4, n5, num_blocks[3]),
        # depth/albedo/ambient decoders batched along G=3 (one grouped GEMM/GN per layer).
        "decoders": init_decoder(kg, 3, ver, ni, no, n1, n2, n3, n4, n5,
                                 unpack_kernel, iconv_kernel, d, out_channels),
    }
    meta = {"version": ver, "decoder_names": (name, "albedo", "ambient")}
    return params, meta


def packnet_forward(params, meta, x_nchw):
    # Single boundary relayout NCHW -> NHWC (+ leading group axis G=1 for the encoder).
    x = jnp.transpose(x_nchw, (0, 2, 3, 1))[None]

    x = apply_Conv2D(params["pre_calc"], x)
    x1 = apply_Conv2D(params["conv1"], x)
    x1p = apply_pack(params["pack1"], x1)
    x2 = apply_resblock(params["conv2"], x1p)
    x2p = apply_pack(params["pack2"], x2)
    x3 = apply_resblock(params["conv3"], x2p)
    x3p = apply_pack(params["pack3"], x3)
    x4 = apply_resblock(params["conv4"], x3p)
    x4p = apply_pack(params["pack4"], x4)
    x5 = apply_resblock(params["conv5"], x4p)
    x5p = apply_pack(params["pack5"], x5)

    outs = apply_decoder(params["decoders"], meta["version"], 3,
                         x5p, x, x1p, x2p, x3p, x4p)

    outputs = {}
    for g, nm in enumerate(meta["decoder_names"]):
        for i in range(4):
            outputs[(nm, i)] = jnp.transpose(outs[i][g], (0, 3, 1, 2))   # back to NCHW
    return outputs


# ----------------------------------------------------------------------------
# Main
# ----------------------------------------------------------------------------

if __name__ == "__main__":
    # Input: NCHW, 3 channels; spatial must be divisible by 2**5 = 32.
    B, C, H, W = 1, 3, 32, 32
    x = jax.random.normal(jax.random.PRNGKey(0), (B, C, H, W), jnp.float32)

    kg = KeyGen(0)
    params, meta = init_packnet(kg, version="1A", cycle_loss=False)

    outputs = packnet_forward(params, meta, x)

    expected = {0: (B, 1, 32, 32), 1: (B, 1, 16, 16), 2: (B, 1, 8, 8), 3: (B, 1, 4, 4)}
    for nm in meta["decoder_names"]:
        for i in range(4):
            o = jax.block_until_ready(outputs[(nm, i)])
            assert o.shape == expected[i], (nm, i, o.shape)
            assert o.dtype == jnp.float32
            assert bool(jnp.all(jnp.isfinite(o)))

    print("KERNEL_OK")
</pallas_src>

<mosaic_0001>
module attributes {stable_mosaic.version = 11 : i64} {
  func.func @_gemm_bias_kernel(%arg0: i32, %arg1: i32, %arg2: i32, %arg3: i32, %arg4: memref<1x256x128xbf16, #tpu.memory_space<vmem>>, %arg5: memref<1x128x128xbf16, #tpu.memory_space<vmem>>, %arg6: memref<1x1x128xf32, #tpu.memory_space<vmem>>, %arg7: memref<1x256x128xf32, #tpu.memory_space<vmem>>, %arg8: memref<256x128xf32, #tpu.memory_space<vmem>>) attributes {dimension_semantics = [#tpu.dimension_semantics<parallel>, #tpu.dimension_semantics<parallel>, #tpu.dimension_semantics<parallel>, #tpu.dimension_semantics<arbitrary>], iteration_bounds = array<i64: 1, 4, 1, 1>, scalar_prefetch = 0 : i64, scratch_operands = 1 : i64, tpu.core_type = #tpu.core_type<tc>, window_params = [{transform_indices = @transform_0, window_bounds = array<i64: 1, 256, 128>}, {transform_indices = @transform_1, window_bounds = array<i64: 1, 128, 128>}, {transform_indices = @transform_2, window_bounds = array<i64: 1, 1, 128>}, {transform_indices = @transform_3, window_bounds = array<i64: 1, 256, 128>}]} {
    %c0_i32 = arith.constant 0 : i32
    %0 = arith.cmpi eq, %arg3, %c0_i32 : i32
    %1 = arith.extui %0 : i1 to i32
    %c0_i32_0 = arith.constant 0 : i32
    %2 = arith.cmpi ne, %1, %c0_i32_0 : i32
    scf.if %2 {
      %c0_12 = arith.constant 0 : index
      %c0_13 = arith.constant 0 : index
      %c0_14 = arith.constant 0 : index
      %14 = vector.load %arg6[%c0_12, %c0_13, %c0_14] : memref<1x1x128xf32, #tpu.memory_space<vmem>>, vector<1x1x128xf32>
      %15 = vector.shape_cast %14 : vector<1x1x128xf32> to vector<1x128xf32>
      %16 = vector.shape_cast %15 : vector<1x128xf32> to vector<1x128xf32>
      %17 = vector.broadcast %16 : vector<1x128xf32> to vector<256x128xf32>
      %c0_15 = arith.constant 0 : index
      %c0_16 = arith.constant 0 : index
      %18 = vector.load %arg8[%c0_15, %c0_16] : memref<256x128xf32, #tpu.memory_space<vmem>>, vector<256x128xf32>
      tpu.vector_store %arg8[%c0_15, %c0_16], %17 {strides = array<i32>} : memref<256x128xf32, #tpu.memory_space<vmem>>, vector<256x128xf32>,
    } else {
    }
    %c0 = arith.constant 0 : index
    %c0_1 = arith.constant 0 : index
    %3 = vector.load %arg8[%c0, %c0_1] : memref<256x128xf32, #tpu.memory_space<vmem>>, vector<256x128xf32>
    %c0_2 = arith.constant 0 : index
    %c0_3 = arith.constant 0 : index
    %c0_4 = arith.constant 0 : index
    %4 = vector.load %arg4[%c0_2, %c0_3, %c0_4] : memref<1x256x128xbf16, #tpu.memory_space<vmem>>, vector<1x256x128xbf16>
    %5 = vector.shape_cast %4 : vector<1x256x128xbf16> to vector<256x128xbf16>
    %c0_5 = arith.constant 0 : index
    %c0_6 = arith.constant 0 : index
    %c0_7 = arith.constant 0 : index
    %6 = vector.load %arg5[%c0_5, %c0_6, %c0_7] : memref<1x128x128xbf16, #tpu.memory_space<vmem>>, vector<1x128x128xbf16>
    %7 = vector.shape_cast %6 : vector<1x128x128xbf16> to vector<128x128xbf16>
    %cst = arith.constant dense<0.000000e+00> : vector<256x128xf32>
    %8 = tpu.matmul %5, %7, %cst {dimension_numbers = #tpu.dot_dimension_numbers<[1], [0], [0], [1], [0, 0, 1, 1], [], []>} : vector<256x128xbf16>, vector<128x128xbf16>, vector<256x128xf32> -> vector<256x128xf32>
    %9 = arith.addf %3, %8 : vector<256x128xf32>
    %c0_8 = arith.constant 0 : index
    %c0_9 = arith.constant 0 : index
    %10 = vector.load %arg8[%c0_8, %c0_9] : memref<256x128xf32, #tpu.memory_space<vmem>>, vector<256x128xf32>
    tpu.vector_store %arg8[%c0_8, %c0_9], %9 {strides = array<i32>} : memref<256x128xf32, #tpu.memory_space<vmem>>, vector<256x128xf32>,
    %c0_i32_10 = arith.constant 0 : i32
    %11 = arith.cmpi eq, %arg3, %c0_i32_10 : i32
    %12 = arith.extui %11 : i1 to i32
    %c0_i32_11 = arith.constant 0 : i32
    %13 = arith.cmpi ne, %12, %c0_i32_11 : i32
    scf.if %13 {
      %c0_12 = arith.constant 0 : index
      %c0_13 = arith.constant 0 : index
      %14 = vector.load %arg8[%c0_12, %c0_13] : memref<256x128xf32, #tpu.memory_space<vmem>>, vector<256x128xf32>
      %c0_14 = arith.constant 0 : index
      %c0_15 = arith.constant 0 : index
      %c0_16 = arith.constant 0 : index
      %15 = vector.load %arg7[%c0_14, %c0_15, %c0_16] : memref<1x256x128xf32, #tpu.memory_space<vmem>>, vector<1x256x128xf32>
      %16 = vector.shape_cast %15 : vector<1x256x128xf32> to vector<256x128xf32>
      %17 = vector.shape_cast %14 : vector<256x128xf32> to vector<1x256x128xf32>
      tpu.vector_store %arg7[%c0_14, %c0_15, %c0_16], %17 {strides = array<i32>} : memref<1x256x128xf32, #tpu.memory_space<vmem>>, vector<1x256x128xf32>,
    } else {
    }
    return
  }
  func.func @transform_0(%arg0: i32, %arg1: i32, %arg2: i32, %arg3: i32) -> (i32, i32, i32) {
    %c0_i32 = arith.constant 0 : i32
    return %arg0, %arg1, %arg3 : i32, i32, i32
  }
  func.func @transform_1(%arg0: i32, %arg1: i32, %arg2: i32, %arg3: i32) -> (i32, i32, i32) {
    %c0_i32 = arith.constant 0 : i32
    return %arg0, %arg3, %arg2 : i32, i32, i32
  }
  func.func @transform_2(%arg0: i32, %arg1: i32, %arg2: i32, %arg3: i32) -> (i32, i32, i32) {
    %c0_i32 = arith.constant 0 : i32
    %c0_i32_0 = arith.constant 0 : i32
    return %arg0, %c0_i32, %arg2 : i32, i32, i32
  }
  func.func @transform_3(%arg0: i32, %arg1: i32, %arg2: i32, %arg3: i32) -> (i32, i32, i32) {
    %c0_i32 = arith.constant 0 : i32
    return %arg0, %arg1, %arg2 : i32, i32, i32
  }
}

</mosaic_0001>

<llo_original>
// kernel: matmul_bias.1
$region0: #{matmul_bias.1}
  #allocation0 [shape = 'u32[]', space=smem, size = 0x4, offset = 0x4, fixed_abs, tag = 'smem constant byte address 0x4 - core index']
  #allocation1 [shape = 'u32[144,128]{1,0:T(1,128)}', space=vmem, size = 0x12000, scoped, tag = 'internal scratch']
  #allocation2 [shape = 'f32[256,128]{1,0:T(8,128)}', space=vmem, size = 0x20000, scoped, tag = 'scratch operand']
  %s0 = inlined_call_operand.vmem [shape: bf16[1,1024,128], index: 0, kind: input, shape index: {}]
  %s1 = inlined_call_operand.vmem [shape: bf16[1,128,128], index: 1, kind: input, shape index: {}]
  %s2 = inlined_call_operand.vmem [shape: f32[1,1,128], index: 2, kind: input, shape index: {}]
  %s3 = inlined_call_operand.vmem [shape: f32[1,1024,128], index: 3, kind: output, shape index: {}]
  %s4 = sld [smem:[#allocation0]]
  $region53: #{matmul_bias.1} parent=0
    _
  %s6 = ssub.s32 1, %s4
  %s7 = scalar_select 0, %s6, %s4
  loop: start=0, step=1, limit=6
  $region2: #{matmul_bias.1} parent=0 // loop_pre_header
    _
  $region3: #{matmul_bias.1} parent=0 // loop_header
    %s9 = sphi 0, %s13
    %p10 = scmp.ge.s32.totalorder %s9, 6
    %s16 = sphi 0, %s42
    %s17 = sphi 0, %s38
    %s18 = sphi 0, %s34
    %s19 = sphi 0, %s30
    %s20 = sphi 0, %s16
    %s21 = sphi 0, %s17
    %s22 = sphi 0, %s18
    %s23 = sphi 0, %s19
    %s24 = sphi 0, %s20
    %s25 = sphi 0, %s21
    %s26 = sphi 0, %s22
    %s27 = sphi 0, %s23
    %s49 = sphi 0, %s51
    %s52 = sphi 0, %s49
    %s53 = sphi 0, %s52
    %s69 = sphi 0, %s53
    %s79 = sphi 0, %s81
    %s82 = sphi 0, %s79
    %s83 = sphi 0, %s82
    %s99 = sphi 0, %s83
    %s107 = sphi 0, %s109
    %s110 = sphi 0, %s107
    %s111 = sphi 0, %s110
    %s127 = sphi 0, %s111
    %s137 = sphi 0, %s139
    %s140 = sphi 0, %s137
    %s141 = sphi 0, %s140
    %s157 = sphi 0, %s141
  $region4: #{matmul_bias.1} parent=0 // loop_header_branch
    %12 = sbr.rel (%p10) target = $region8
  $region5: #{matmul_bias.1} parent=0 // loop_body
    %s14 = ssub.s32 %s9, 1
    %s15 = ssub.s32 %s9, 2
    %s28 = sadd.s32 1, %s19
    %p29 = scmp.ge.s32.totalorder %s28, 1
    %s30 = scalar_select %p29, 0, %s28
    %s31 = sadd.s32 1, %s18
    %s32 = scalar_select %p29, %s31, %s18
    %p33 = scmp.ge.s32.totalorder %s32, 1
    %s34 = scalar_select %p33, 0, %s32
    %s35 = sadd.s32 1, %s17
    %s36 = scalar_select %p33, %s35, %s17
    %p37 = scmp.ge.s32.totalorder %s36, 4
    %s38 = scalar_select %p37, 0, %s36
    %s39 = sadd.s32 1, %s16
    %s40 = scalar_select %p37, %s39, %s16
    %p41 = scmp.ge.s32.totalorder %s40, 1
    %s42 = scalar_select %p41, 0, %s40
    %s43 = ssub.s32 %s16, %s42
    %s44 = ssub.s32 %s17, %s38
    %s45 = sor.u32 %s43, %s44
    %s46 = ssub.s32 %s19, %s30
    %s47 = sor.u32 %s45, %s46
    %p48 = scmp.eq.s32.totalorder %s47, 0
    %s50 = sadd.s32 %s49, 1
    %s51 = scalar_select %p48, %s49, %s50
    %p54 = pneg %p48
    %p55 = scmp.eq.s32.totalorder %s9, 3
    %p56 = por %p54, %p55
    %p57 = scmp.ne.s32.totalorder %s49, %s52
    %p58 = scmp.eq.s32.totalorder %s9, 0
    %p59 = por %p57, %p58
    %p60 = scmp.ne.s32.totalorder %s49, %s52
    %p61 = scmp.eq.s32.totalorder %s14, 3
    %p62 = por %p60, %p61
    %p63 = scmp.ne.s32.totalorder %s52, %s53
    %p64 = scmp.eq.s32.totalorder %s14, 0
    %p65 = por %p63, %p64
    %p66 = scmp.ne.s32.totalorder %s52, %s53
    %p67 = scmp.eq.s32.totalorder %s15, 3
    %p68 = por %p66, %p67
    %p70 = scmp.ne.s32.totalorder %s53, %s69
    %p71 = scmp.eq.s32.totalorder %s15, 0
    %p72 = por %p70, %p71
    %s73 = ssub.s32 %s16, %s42
    %s74 = ssub.s32 %s19, %s30
    %s75 = sor.u32 %s73, %s74
    %s76 = ssub.s32 %s18, %s34
    %s77 = sor.u32 %s75, %s76
    %p78 = scmp.eq.s32.totalorder %s77, 0
    %s80 = sadd.s32 %s79, 1
    %s81 = scalar_select %p78, %s79, %s80
    %p84 = pneg %p78
    %p85 = scmp.eq.s32.totalorder %s9, 3
    %p86 = por %p84, %p85
    %p87 = scmp.ne.s32.totalorder %s79, %s82
    %p88 = scmp.eq.s32.totalorder %s9, 0
    %p89 = por %p87, %p88
    %p90 = scmp.ne.s32.totalorder %s79, %s82
    %p91 = scmp.eq.s32.totalorder %s14, 3
    %p92 = por %p90, %p91
    %p93 = scmp.ne.s32.totalorder %s82, %s83
    %p94 = scmp.eq.s32.totalorder %s14, 0
    %p95 = por %p93, %p94
    %p96 = scmp.ne.s32.totalorder %s82, %s83
    %p97 = scmp.eq.s32.totalorder %s15, 3
    %p98 = por %p96, %p97
    %p100 = scmp.ne.s32.totalorder %s83, %s99
    %p101 = scmp.eq.s32.totalorder %s15, 0
    %p102 = por %p100, %p101
    %s103 = ssub.s32 %s16, %s42
    %s104 = ssub.s32 %s18, %s34
    %s105 = sor.u32 %s103, %s104
    %p106 = scmp.eq.s32.totalorder %s105, 0
    %s108 = sadd.s32 %s107, 1
    %s109 = scalar_select %p106, %s107, %s108
    %p112 = pneg %p106
    %p113 = scmp.eq.s32.totalorder %s9, 3
    %p114 = por %p112, %p113
    %p115 = scmp.ne.s32.totalorder %s107, %s110
    %p116 = scmp.eq.s32.totalorder %s9, 0
    %p117 = por %p115, %p116
    %p118 = scmp.ne.s32.totalorder %s107, %s110
    %p119 = scmp.eq.s32.totalorder %s14, 3
    %p120 = por %p118, %p119
    %p121 = scmp.ne.s32.totalorder %s110, %s111
    %p122 = scmp.eq.s32.totalorder %s14, 0
    %p123 = por %p121, %p122
    %p124 = scmp.ne.s32.totalorder %s110, %s111
    %p125 = scmp.eq.s32.totalorder %s15, 3
    %p126 = por %p124, %p125
    %p128 = scmp.ne.s32.totalorder %s111, %s127
    %p129 = scmp.eq.s32.totalorder %s15, 0
    %p130 = por %p128, %p129
    %s131 = ssub.s32 %s16, %s42
    %s132 = ssub.s32 %s17, %s38
    %s133 = sor.u32 %s131, %s132
    %s134 = ssub.s32 %s18, %s34
    %s135 = sor.u32 %s133, %s134
    %p136 = scmp.eq.s32.totalorder %s135, 0
    %s138 = sadd.s32 %s137, 1
    %s139 = scalar_select %p136, %s137, %s138
    %p142 = pneg %p136
    %p143 = scmp.eq.s32.totalorder %s9, 3
    %p144 = por %p142, %p143
    %p145 = scmp.ne.s32.totalorder %s137, %s140
    %p146 = scmp.eq.s32.totalorder %s9, 0
    %p147 = por %p145, %p146
    %p148 = scmp.ne.s32.totalorder %s137, %s140
    %p149 = scmp.eq.s32.totalorder %s14, 3
    %p150 = por %p148, %p149
    %p151 = scmp.ne.s32.totalorder %s140, %s141
    %p152 = scmp.eq.s32.totalorder %s14, 0
    %p153 = por %p151, %p152
    %p154 = scmp.ne.s32.totalorder %s140, %s141
    %p155 = scmp.eq.s32.totalorder %s15, 3
    %p156 = por %p154, %p155
    %p158 = scmp.ne.s32.totalorder %s141, %s157
    %p159 = scmp.eq.s32.totalorder %s15, 0
    %p160 = por %p158, %p159
    %p161 = scmp.le.s32.totalorder 1, %s9
    %p162 = scmp.lt.s32.totalorder %s9, 5
    %p163 = pnand %p161, %p162
    %p164 = pneg %p163
    // Predicated region
    $region9: #{matmul_bias.1} parent=5 // pred_check
      _
    $region10: #{matmul_bias.1} parent=5 // pred_check_branch
      %166 = sbr.rel (%p163) target = $region12
    $region11: #{matmul_bias.1} parent=5 // pred_region
      %s167 = ssub.s32 %s9, 1
      // Predicated region
      $region13: #{matmul_bias.1} parent=11 // pred_check
        %p168 = pneg %p95
      $region14: #{matmul_bias.1} parent=11 // pred_check_branch
        %170 = sbr.rel (%p168) target = $region16
      $region15: #{matmul_bias.1} parent=11 // pred_region
        %s171 = smul.u32 16, %s23
        %p172 = scmp.lt.s32.totalorder %s20, 0
        %s173 = scalar_select %p172, %s20, 0
        %p174 = scmp.lt.s32.totalorder %s171, 15
        %s175 = scalar_select %p174, %s171, 15
        %p176 = scmp.lt.s32.totalorder %s22, 0
        %s177 = scalar_select %p176, %s22, 0
        %s178 = sadd.s32 %s177, %s175
        %s179 = smul.addr %s173, 16
        %s180 = sadd.s32 %s178, %s179
        %s181 = smul.addr %s180, 4
        %s182 = scalar_lea.vmem %s1, %s181
        %s183 = smul.u32 16, %s23
      $region16: #{matmul_bias.1} parent=11 // pred_fallthru
        _
      // Predicated region
      $region17: #{matmul_bias.1} parent=11 // pred_check
        %p184 = pneg %p123
      $region18: #{matmul_bias.1} parent=11 // pred_check_branch
        %186 = sbr.rel (%p184) target = $region20
      $region19: #{matmul_bias.1} parent=11 // pred_region
        %p187 = scmp.lt.s32.totalorder %s20, 0
        %s188 = scalar_select %p187, %s20, 0
        %p189 = scmp.lt.s32.totalorder %s22, 0
        %s190 = scalar_select %p189, %s22, 0
        %s191 = sadd.s32 %s190, %s188
        %s192 = scalar_lea.vmem %s2, %s191
      $region20: #{matmul_bias.1} parent=11 // pred_fallthru
        _
    $region12: #{matmul_bias.1} parent=5 // pred_fallthru
      _
    %p193 = scmp.lt.s32.totalorder %s9, 4
    // Predicated region
    $region21: #{matmul_bias.1} parent=5 // pred_check
      %p194 = pneg %p193
    $region22: #{matmul_bias.1} parent=5 // pred_check_branch
      %196 = sbr.rel (%p194) target = $region24
    $region23: #{matmul_bias.1} parent=5 // pred_region
      // Predicated region
      $region25: #{matmul_bias.1} parent=23 // pred_check
        %p197 = pneg %p59
      $region26: #{matmul_bias.1} parent=23 // pred_check_branch
        %199 = sbr.rel (%p197) target = $region28
      $region27: #{matmul_bias.1} parent=23 // pred_region
        %s200 = smul.u32 32, %s17
        %p201 = scmp.lt.s32.totalorder %s16, 0
        %s202 = scalar_select %p201, %s16, 0
        %p203 = scmp.lt.s32.totalorder %s200, 127
        %s204 = scalar_select %p203, %s200, 127
        %p205 = scmp.lt.s32.totalorder %s19, 0
        %s206 = scalar_select %p205, %s19, 0
        %s207 = sadd.s32 %s206, %s204
        %s208 = smul.addr %s202, 128
        %s209 = sadd.s32 %s207, %s208
        %s210 = smul.addr %s209, 4
        %s211 = scalar_lea.vmem %s0, %s210
        %s212 = smul.u32 32, %s17
      $region28: #{matmul_bias.1} parent=23 // pred_fallthru
        _
    $region24: #{matmul_bias.1} parent=5 // pred_fallthru
      _
    %p213 = scmp.le.s32.totalorder 1, %s9
    %p214 = scmp.lt.s32.totalorder %s9, 5
    %p215 = pnand %p213, %p214
    %p216 = pneg %p215
    // Predicated region
    $region29: #{matmul_bias.1} parent=5 // pred_check
      _
    $region30: #{matmul_bias.1} parent=5 // pred_check_branch
      %218 = sbr.rel (%p215) target = $region32
    $region31: #{matmul_bias.1} parent=5 // pred_region
      %s219 = ssub.s32 %s9, 1
      %s220 = smul.u32 32, %s21
      %p221 = scmp.lt.s32.totalorder %s20, 0
      %s222 = scalar_select %p221, %s20, 0
      %p223 = scmp.lt.s32.totalorder %s220, 127
      %s224 = scalar_select %p223, %s220, 127
      %p225 = scmp.lt.s32.totalorder %s23, 0
      %s226 = scalar_select %p225, %s23, 0
      %s227 = sadd.s32 %s226, %s224
      %s228 = smul.addr %s222, 128
      %s229 = sadd.s32 %s227, %s228
      %s230 = smul.addr %s229, 4
      %s231 = scalar_lea.vmem %s0, %s230
      %p232 = pneg %p65
      %p233 = pneg %p62
      %s234 = smul.u32 16, %s23
      %p235 = scmp.lt.s32.totalorder %s20, 0
      %s236 = scalar_select %p235, %s20, 0
      %p237 = scmp.lt.s32.totalorder %s234, 15
      %s238 = scalar_select %p237, %s234, 15
      %p239 = scmp.lt.s32.totalorder %s22, 0
      %s240 = scalar_select %p239, %s22, 0
      %s241 = sadd.s32 %s240, %s238
      %s242 = smul.addr %s236, 16
      %s243 = sadd.s32 %s241, %s242
      %s244 = smul.addr %s243, 4
      %s245 = scalar_lea.vmem %s1, %s244
      %p246 = pneg %p95
      %p247 = pneg %p92
      %p248 = scmp.lt.s32.totalorder %s20, 0
      %s249 = scalar_select %p248, %s20, 0
      %p250 = scmp.lt.s32.totalorder %s22, 0
      %s251 = scalar_select %p250, %s22, 0
      %s252 = sadd.s32 %s251, %s249
      %s253 = scalar_lea.vmem %s2, %s252
      %p254 = pneg %p123
      %p255 = pneg %p120
      %p256 = pneg %p153
      %p257 = pneg %p150
      %s258 = smul.u32 32, %s21
      %p259 = scmp.lt.s32.totalorder %s20, 0
      %s260 = scalar_select %p259, %s20, 0
      %p261 = scmp.lt.s32.totalorder %s258, 127
      %s262 = scalar_select %p261, %s258, 127
      %p263 = scmp.lt.s32.totalorder %s22, 0
      %s264 = scalar_select %p263, %s22, 0
      %s265 = sadd.s32 %s264, %s262
      %s266 = smul.addr %s260, 128
      %s267 = sadd.s32 %s265, %s266
      %s268 = smul.addr %s267, 8
      %s269 = scalar_lea.vmem %s3, %s268
      %s270 = smul.u32 32, %s21
      %p271 = scmp.lt.s32.totalorder %s20, 0
      %s272 = scalar_select %p271, %s20, 0
      %p273 = scmp.lt.s32.totalorder %s270, 127
      %s274 = scalar_select %p273, %s270, 127
      %p275 = scmp.lt.s32.totalorder %s23, 0
      %s276 = scalar_select %p275, %s23, 0
      %s277 = sadd.s32 %s276, %s274
      %s278 = smul.addr %s272, 128
      %s279 = sadd.s32 %s277, %s278
      %s280 = smul.addr %s279, 4
      %s281 = scalar_lea.vmem %s0, %s280
      %s282 = smul.u32 32, %s21
      %s283 = smul.u32 16, %s23
      %p284 = scmp.lt.s32.totalorder %s20, 0
      %s285 = scalar_select %p284, %s20, 0
      %p286 = scmp.lt.s32.totalorder %s283, 15
      %s287 = scalar_select %p286, %s283, 15
      %p288 = scmp.lt.s32.totalorder %s22, 0
      %s289 = scalar_select %p288, %s22, 0
      %s290 = sadd.s32 %s289, %s287
      %s291 = smul.addr %s285, 16
      %s292 = sadd.s32 %s290, %s291
      %s293 = smul.addr %s292, 4
      %s294 = scalar_lea.vmem %s1, %s293
      %s295 = smul.u32 16, %s23
      %p296 = scmp.lt.s32.totalorder %s20, 0
      %s297 = scalar_select %p296, %s20, 0
      %p298 = scmp.lt.s32.totalorder %s22, 0
      %s299 = scalar_select %p298, %s22, 0
      %s300 = sadd.s32 %s299, %s297
      %s301 = scalar_lea.vmem %s2, %s300
      %s302 = smul.u32 32, %s21
      %p303 = scmp.lt.s32.totalorder %s20, 0
      %s304 = scalar_select %p303, %s20, 0
      %p305 = scmp.lt.s32.totalorder %s302, 127
      %s306 = scalar_select %p305, %s302, 127
      %p307 = scmp.lt.s32.totalorder %s22, 0
      %s308 = scalar_select %p307, %s22, 0
      %s309 = sadd.s32 %s308, %s306
      %s310 = smul.addr %s304, 128
      %s311 = sadd.s32 %s309, %s310
      %s312 = smul.addr %s311, 8
      %s313 = scalar_lea.vmem %s3, %s312
      %s314 = smul.u32 32, %s21
      %p316 = scmp.eq.s32.totalorder %s23, 0
      // Predicated region
      $region33: #{matmul_bias.1} parent=31 // pred_check
        %p317 = pneg %p316
      $region34: #{matmul_bias.1} parent=31 // pred_check_branch
        %319 = sbr.rel (%p317) target = $region36
      $region35: #{matmul_bias.1} parent=31 // pred_region
        %v320 = vld [vmem:[%s301] sm:$0x1]
        %v322 = vlaneseq
        %v323 = vshrl.u32 %v322, 7
        %v324 = vsub.s32 0, %v323
        %v325 = vrot.slane %v320, %v324
        %327 = vst [vmem:[#allocation2] sm:$0xff] %v325
        %328 = vst [vmem:[#allocation2 + $0x8] sm:$0xff] %v325
        %329 = vst [vmem:[#allocation2 + $0x10] sm:$0xff] %v325
        %330 = vst [vmem:[#allocation2 + $0x18] sm:$0xff] %v325
        %331 = vst [vmem:[#allocation2 + $0x20] sm:$0xff] %v325
        %332 = vst [vmem:[#allocation2 + $0x28] sm:$0xff] %v325
        %333 = vst [vmem:[#allocation2 + $0x30] sm:$0xff] %v325
        %334 = vst [vmem:[#allocation2 + $0x38] sm:$0xff] %v325
        %335 = vst [vmem:[#allocation2 + $0x40] sm:$0xff] %v325
        %336 = vst [vmem:[#allocation2 + $0x48] sm:$0xff] %v325
        %337 = vst [vmem:[#allocation2 + $0x50] sm:$0xff] %v325
        %338 = vst [vmem:[#allocation2 + $0x58] sm:$0xff] %v325
        %339 = vst [vmem:[#allocation2 + $0x60] sm:$0xff] %v325
        %340 = vst [vmem:[#allocation2 + $0x68] sm:$0xff] %v325
        %341 = vst [vmem:[#allocation2 + $0x70] sm:$0xff] %v325
        %342 = vst [vmem:[#allocation2 + $0x78] sm:$0xff] %v325
        %343 = vst [vmem:[#allocation2 + $0x80] sm:$0xff] %v325
        %344 = vst [vmem:[#allocation2 + $0x88] sm:$0xff] %v325
        %345 = vst [vmem:[#allocation2 + $0x90] sm:$0xff] %v325
        %346 = vst [vmem:[#allocation2 + $0x98] sm:$0xff] %v325
        %347 = vst [vmem:[#allocation2 + $0xa0] sm:$0xff] %v325
        %348 = vst [vmem:[#allocation2 + $0xa8] sm:$0xff] %v325
        %349 = vst [vmem:[#allocation2 + $0xb0] sm:$0xff] %v325
        %350 = vst [vmem:[#allocation2 + $0xb8] sm:$0xff] %v325
        %351 = vst [vmem:[#allocation2 + $0xc0] sm:$0xff] %v325
        %352 = vst [vmem:[#allocation2 + $0xc8] sm:$0xff] %v325
        %353 = vst [vmem:[#allocation2 + $0xd0] sm:$0xff] %v325
        %354 = vst [vmem:[#allocation2 + $0xd8] sm:$0xff] %v325
        %355 = vst [vmem:[#allocation2 + $0xe0] sm:$0xff] %v325
        %356 = vst [vmem:[#allocation2 + $0xe8] sm:$0xff] %v325
        %357 = vst [vmem:[#allocation2 + $0xf0] sm:$0xff] %v325
        %358 = vst [vmem:[#allocation2 + $0xf8] sm:$0xff] %v325
      $region36: #{matmul_bias.1} parent=31 // pred_fallthru
        _
      %v359 = vld [vmem:[#allocation2] sm:$0xff]
      %v360 = vld [vmem:[#allocation2 + $0x8] sm:$0xff]
      %v361 = vld [vmem:[#allocation2 + $0x10] sm:$0xff]
      %v362 = vld [vmem:[#allocation2 + $0x18] sm:$0xff]
      %v363 = vld [vmem:[#allocation2 + $0x20] sm:$0xff]
      %v364 = vld [vmem:[#allocation2 + $0x28] sm:$0xff]
      %v365 = vld [vmem:[#allocation2 + $0x30] sm:$0xff]
      %v366 = vld [vmem:[#allocation2 + $0x38] sm:$0xff]
      %v367 = vld [vmem:[#allocation2 + $0x40] sm:$0xff]
      %v368 = vld [vmem:[#allocation2 + $0x48] sm:$0xff]
      %v369 = vld [vmem:[#allocation2 + $0x50] sm:$0xff]
      %v370 = vld [vmem:[#allocation2 + $0x58] sm:$0xff]
      %v371 = vld [vmem:[#allocation2 + $0x60] sm:$0xff]
      %v372 = vld [vmem:[#allocation2 + $0x68] sm:$0xff]
      %v373 = vld [vmem:[#allocation2 + $0x70] sm:$0xff]
      %v374 = vld [vmem:[#allocation2 + $0x78] sm:$0xff]
      %v375 = vld [vmem:[#allocation2 + $0x80] sm:$0xff]
      %v376 = vld [vmem:[#allocation2 + $0x88] sm:$0xff]
      %v377 = vld [vmem:[#allocation2 + $0x90] sm:$0xff]
      %v378 = vld [vmem:[#allocation2 + $0x98] sm:$0xff]
      %v379 = vld [vmem:[#allocation2 + $0xa0] sm:$0xff]
      %v380 = vld [vmem:[#allocation2 + $0xa8] sm:$0xff]
      %v381 = vld [vmem:[#allocation2 + $0xb0] sm:$0xff]
      %v382 = vld [vmem:[#allocation2 + $0xb8] sm:$0xff]
      %v383 = vld [vmem:[#allocation2 + $0xc0] sm:$0xff]
      %v384 = vld [vmem:[#allocation2 + $0xc8] sm:$0xff]
      %v385 = vld [vmem:[#allocation2 + $0xd0] sm:$0xff]
      %v386 = vld [vmem:[#allocation2 + $0xd8] sm:$0xff]
      %v387 = vld [vmem:[#allocation2 + $0xe0] sm:$0xff]
      %v388 = vld [vmem:[#allocation2 + $0xe8] sm:$0xff]
      %v389 = vld [vmem:[#allocation2 + $0xf0] sm:$0xff]
      %v390 = vld [vmem:[#allocation2 + $0xf8] sm:$0xff]
      %v391 = vld [vmem:[%s281] sm:$0xf]
      %v392 = vld [vmem:[%s281 + $0x4] sm:$0xf]
      %v393 = vld [vmem:[%s281 + $0x8] sm:$0xf]
      %v394 = vld [vmem:[%s281 + $0xc] sm:$0xf]
      %v395 = vld [vmem:[%s281 + $0x10] sm:$0xf]
      %v396 = vld [vmem:[%s281 + $0x14] sm:$0xf]
      %v397 = vld [vmem:[%s281 + $0x18] sm:$0xf]
      %v398 = vld [vmem:[%s281 + $0x1c] sm:$0xf]
      %v399 = vld [vmem:[%s281 + $0x20] sm:$0xf]
      %v400 = vld [vmem:[%s281 + $0x24] sm:$0xf]
      %v401 = vld [vmem:[%s281 + $0x28] sm:$0xf]
      %v402 = vld [vmem:[%s281 + $0x2c] sm:$0xf]
      %v403 = vld [vmem:[%s281 + $0x30] sm:$0xf]
      %v404 = vld [vmem:[%s281 + $0x34] sm:$0xf]
      %v405 = vld [vmem:[%s281 + $0x38] sm:$0xf]
      %v406 = vld [vmem:[%s281 + $0x3c] sm:$0xf]
      %v407 = vld [vmem:[%s281 + $0x40] sm:$0xf]
      %v408 = vld [vmem:[%s281 + $0x44] sm:$0xf]
      %v409 = vld [vmem:[%s281 + $0x48] sm:$0xf]
      %v410 = vld [vmem:[%s281 + $0x4c] sm:$0xf]
      %v411 = vld [vmem:[%s281 + $0x50] sm:$0xf]
      %v412 = vld [vmem:[%s281 + $0x54] sm:$0xf]
      %v413 = vld [vmem:[%s281 + $0x58] sm:$0xf]
      %v414 = vld [vmem:[%s281 + $0x5c] sm:$0xf]
      %v415 = vld [vmem:[%s281 + $0x60] sm:$0xf]
      %v416 = vld [vmem:[%s281 + $0x64] sm:$0xf]
      %v417 = vld [vmem:[%s281 + $0x68] sm:$0xf]
      %v418 = vld [vmem:[%s281 + $0x6c] sm:$0xf]
      %v419 = vld [vmem:[%s281 + $0x70] sm:$0xf]
      %v420 = vld [vmem:[%s281 + $0x74] sm:$0xf]
      %v421 = vld [vmem:[%s281 + $0x78] sm:$0xf]
      %v422 = vld [vmem:[%s281 + $0x7c] sm:$0xf]
      %v423 = vld [vmem:[%s294] sm:$0xf]
      %v424 = vld [vmem:[%s294 + $0x4] sm:$0xf]
      %v425 = vld [vmem:[%s294 + $0x8] sm:$0xf]
      %v426 = vld [vmem:[%s294 + $0xc] sm:$0xf]
      %v427 = vld [vmem:[%s294 + $0x10] sm:$0xf]
      %v428 = vld [vmem:[%s294 + $0x14] sm:$0xf]
      %v429 = vld [vmem:[%s294 + $0x18] sm:$0xf]
      %v430 = vld [vmem:[%s294 + $0x1c] sm:$0xf]
      %v431 = vld [vmem:[%s294 + $0x20] sm:$0xf]
      %v432 = vld [vmem:[%s294 + $0x24] sm:$0xf]
      %v433 = vld [vmem:[%s294 + $0x28] sm:$0xf]
      %v434 = vld [vmem:[%s294 + $0x2c] sm:$0xf]
      %v435 = vld [vmem:[%s294 + $0x30] sm:$0xf]
      %v436 = vld [vmem:[%s294 + $0x34] sm:$0xf]
      %v437 = vld [vmem:[%s294 + $0x38] sm:$0xf]
      %v438 = vld [vmem:[%s294 + $0x3c] sm:$0xf]
      %v471 = vunpack.c.l.b16 %v391
      %v472 = vunpack.c.l.b16 %v392
      %v473 = vunpack.c.l.b16 %v393
      %v474 = vunpack.c.l.b16 %v394
      %v475 = vunpack.c.l.b16 %v395
      %v476 = vunpack.c.l.b16 %v396
      %v477 = vunpack.c.l.b16 %v397
      %v478 = vunpack.c.l.b16 %v398
      %v479 = vunpack.c.l.b16 %v399
      %v480 = vunpack.c.l.b16 %v400
      %v481 = vunpack.c.l.b16 %v401
      %v482 = vunpack.c.l.b16 %v402
      %v483 = vunpack.c.l.b16 %v403
      %v484 = vunpack.c.l.b16 %v404
      %v485 = vunpack.c.l.b16 %v405
      %v486 = vunpack.c.l.b16 %v406
      %v487 = vunpack.c.l.b16 %v407
      %v488 = vunpack.c.l.b16 %v408
      %v489 = vunpack.c.l.b16 %v409
      %v490 = vunpack.c.l.b16 %v410
      %v491 = vunpack.c.l.b16 %v411
      %v492 = vunpack.c.l.b16 %v412
      %v493 = vunpack.c.l.b16 %v413
      %v494 = vunpack.c.l.b16 %v414
      %v495 = vunpack.c.l.b16 %v415
      %v496 = vunpack.c.l.b16 %v416
      %v497 = vunpack.c.l.b16 %v417
      %v498 = vunpack.c.l.b16 %v418
      %v499 = vunpack.c.l.b16 %v419
      %v500 = vunpack.c.l.b16 %v420
      %v501 = vunpack.c.l.b16 %v421
      %v502 = vunpack.c.l.b16 %v422
      %v503 = vpack.c.b16 %v472, %v471
      %v504 = vpack.c.b16 %v474, %v473
      %v505 = vpack.c.b16 %v476, %v475
      %v506 = vpack.c.b16 %v478, %v477
      %v507 = vpack.c.b16 %v480, %v479
      %v508 = vpack.c.b16 %v482, %v481
      %v509 = vpack.c.b16 %v484, %v483
      %v510 = vpack.c.b16 %v486, %v485
      %v511 = vpack.c.b16 %v488, %v487
      %v512 = vpack.c.b16 %v490, %v489
      %v513 = vpack.c.b16 %v492, %v491
      %v514 = vpack.c.b16 %v494, %v493
      %v515 = vpack.c.b16 %v496, %v495
      %v516 = vpack.c.b16 %v498, %v497
      %v517 = vpack.c.b16 %v500, %v499
      %v518 = vpack.c.b16 %v502, %v501
      %v551 = vunpack.c.l.b16 %v423
      %v552 = vunpack.c.l.b16 %v424
      %v553 = vunpack.c.l.b16 %v425
      %v554 = vunpack.c.l.b16 %v426
      %v555 = vunpack.c.l.b16 %v427
      %v556 = vunpack.c.l.b16 %v428
      %v557 = vunpack.c.l.b16 %v429
      %v558 = vunpack.c.l.b16 %v430
      %v559 = vunpack.c.l.b16 %v431
      %v560 = vunpack.c.l.b16 %v432
      %v561 = vunpack.c.l.b16 %v433
      %v562 = vunpack.c.l.b16 %v434
      %v563 = vunpack.c.l.b16 %v435
      %v564 = vunpack.c.l.b16 %v436
      %v565 = vunpack.c.l.b16 %v437
      %v566 = vunpack.c.l.b16 %v438
      %v567 = vpack.c.b16 %v552, %v551
      %v568 = vpack.c.b16 %v554, %v553
      %v569 = vpack.c.b16 %v556, %v555
      %v570 = vpack.c.b16 %v558, %v557
      %v571 = vpack.c.b16 %v560, %v559
      %v572 = vpack.c.b16 %v562, %v561
      %v573 = vpack.c.b16 %v564, %v563
      %v574 = vpack.c.b16 %v566, %v565
      %583 = vmatprep.subr.bf16.mxu0 0
      %584 = vmatpush1.bf16.msra.mxu0 %v567
      %585 = vmatprep.subr.bf16.mxu0 0
      %586 = vmatpush1.bf16.msra.mxu0 %v568
      %587 = vmatprep.subr.bf16.mxu0 0
      %588 = vmatpush1.bf16.msra.mxu0 %v569
      %589 = vmatprep.subr.bf16.mxu0 0
      %590 = vmatpush1.bf16.msra.mxu0 %v570
      %591 = vmatprep.subr.bf16.mxu0 0
      %592 = vmatpush1.bf16.msra.mxu0 %v571
      %593 = vmatprep.subr.bf16.mxu0 0
      %594 = vmatpush1.bf16.msra.mxu0 %v572
      %595 = vmatprep.subr.bf16.mxu0 0
      %596 = vmatpush1.bf16.msra.mxu0 %v573
      %597 = vmatprep.subr.bf16.mxu0 0
      %598 = vmatpush1.bf16.msra.mxu0 %v574
      %599 = vmatprep.subr.bf16.mxu0 0
      %600 = vmatpush1.bf16.msra.mxu0 0
      %601 = vmatprep.subr.bf16.mxu0 0
      %602 = vmatpush1.bf16.msra.mxu0 0
      %603 = vmatprep.subr.bf16.mxu0 0
      %604 = vmatpush1.bf16.msra.mxu0 0
      %605 = vmatprep.subr.bf16.mxu0 0
      %606 = vmatpush1.bf16.msra.mxu0 0
      %607 = vmatprep.subr.bf16.mxu0 0
      %608 = vmatpush1.bf16.msra.mxu0 0
      %609 = vmatprep.subr.bf16.mxu0 0
      %610 = vmatpush1.bf16.msra.mxu0 0
      %611 = vmatprep.subr.bf16.mxu0 0
      %612 = vmatpush1.bf16.msra.mxu0 0
      %613 = vmatprep.subr.bf16.mxu0 0
      %614 = vmatpush1.bf16.msra.mxu0 0
      %615 = vmatprep.mubr.bf16.mxu0 0
      %616 = vmatmul.mubr.bf16.gmra.mrb[0].mxu0 %v503
      %v617 = vpop.f32.mrb[0].mxu0
      %v618 = vadd.f32 0.0, %v617
      %v619 = vpop.f32.mrb[0].mxu0
      %v620 = vpop.f32.mrb[0].mxu0
      %v621 = vadd.f32 0.0, %v620
      %v622 = vpop.f32.mrb[0].mxu0
      %623 = vmatprep.mubr.bf16.mxu0 0
      %624 = vmatmul.mubr.bf16.gmra.mrb[0].mxu0 %v504
      %v625 = vpop.f32.mrb[0].mxu0
      %v626 = vadd.f32 0.0, %v625
      %v627 = vpop.f32.mrb[0].mxu0
      %v628 = vpop.f32.mrb[0].mxu0
      %v629 = vadd.f32 0.0, %v628
      %v630 = vpop.f32.mrb[0].mxu0
      %631 = vmatprep.mubr.bf16.mxu0 0
      %632 = vmatmul.mubr.bf16.gmra.mrb[0].mxu0 %v505
      %v633 = vpop.f32.mrb[0].mxu0
      %v634 = vadd.f32 0.0, %v633
      %v635 = vpop.f32.mrb[0].mxu0
      %v636 = vpop.f32.mrb[0].mxu0
      %v637 = vadd.f32 0.0, %v636
      %v638 = vpop.f32.mrb[0].mxu0
      %639 = vmatprep.mubr.bf16.mxu0 0
      %640 = vmatmul.mubr.bf16.gmra.mrb[0].mxu0 %v506
      %v641 = vpop.f32.mrb[0].mxu0
      %v642 = vadd.f32 0.0, %v641
      %v643 = vpop.f32.mrb[0].mxu0
      %v644 = vpop.f32.mrb[0].mxu0
      %v645 = vadd.f32 0.0, %v644
      %v646 = vpop.f32.mrb[0].mxu0
      %647 = vmatprep.mubr.bf16.mxu0 0
      %648 = vmatmul.mubr.bf16.gmra.mrb[0].mxu0 %v507
      %v649 = vpop.f32.mrb[0].mxu0
      %v650 = vadd.f32 0.0, %v649
      %v651 = vpop.f32.mrb[0].mxu0
      %v652 = vpop.f32.mrb[0].mxu0
      %v653 = vadd.f32 0.0, %v652
      %v654 = vpop.f32.mrb[0].mxu0
      %655 = vmatprep.mubr.bf16.mxu0 0
      %656 = vmatmul.mubr.bf16.gmra.mrb[0].mxu0 %v508
      %v657 = vpop.f32.mrb[0].mxu0
      %v658 = vadd.f32 0.0, %v657
      %v659 = vpop.f32.mrb[0].mxu0
      %v660 = vpop.f32.mrb[0].mxu0
      %v661 = vadd.f32 0.0, %v660
      %v662 = vpop.f32.mrb[0].mxu0
      %663 = vmatprep.mubr.bf16.mxu0 0
      %664 = vmatmul.mubr.bf16.gmra.mrb[0].mxu0 %v509
      %v665 = vpop.f32.mrb[0].mxu0
      %v666 = vadd.f32 0.0, %v665
      %v667 = vpop.f32.mrb[0].mxu0
      %v668 = vpop.f32.mrb[0].mxu0
      %v669 = vadd.f32 0.0, %v668
      %v670 = vpop.f32.mrb[0].mxu0
      %671 = vmatprep.mubr.bf16.mxu0 0
      %672 = vmatmul.mubr.bf16.gmra.mrb[0].mxu0 %v510
      %v673 = vpop.f32.mrb[0].mxu0
      %v674 = vadd.f32 0.0, %v673
      %v675 = vpop.f32.mrb[0].mxu0
      %v676 = vpop.f32.mrb[0].mxu0
      %v677 = vadd.f32 0.0, %v676
      %v678 = vpop.f32.mrb[0].mxu0
      %679 = vmatprep.mubr.bf16.mxu0 0
      %680 = vmatmul.mubr.bf16.gmra.mrb[0].mxu0 %v511
      %v681 = vpop.f32.mrb[0].mxu0
      %v682 = vadd.f32 0.0, %v681
      %v683 = vpop.f32.mrb[0].mxu0
      %v684 = vpop.f32.mrb[0].mxu0
      %v685 = vadd.f32 0.0, %v684
      %v686 = vpop.f32.mrb[0].mxu0
      %687 = vmatprep.mubr.bf16.mxu0 0
      %688 = vmatmul.mubr.bf16.gmra.mrb[0].mxu0 %v512
      %v689 = vpop.f32.mrb[0].mxu0
      %v690 = vadd.f32 0.0, %v689
      %v691 = vpop.f32.mrb[0].mxu0
      %v692 = vpop.f32.mrb[0].mxu0
      %v693 = vadd.f32 0.0, %v692
      %v694 = vpop.f32.mrb[0].mxu0
      %695 = vmatprep.mubr.bf16.mxu0 0
      %696 = vmatmul.mubr.bf16.gmra.mrb[0].mxu0 %v513
      %v697 = vpop.f32.mrb[0].mxu0
      %v698 = vadd.f32 0.0, %v697
      %v699 = vpop.f32.mrb[0].mxu0
      %v700 = vpop.f32.mrb[0].mxu0
      %v701 = vadd.f32 0.0, %v700
      %v702 = vpop.f32.mrb[0].mxu0
      %703 = vmatprep.mubr.bf16.mxu0 0
      %704 = vmatmul.mubr.bf16.gmra.mrb[0].mxu0 %v514
      %v705 = vpop.f32.mrb[0].mxu0
      %v706 = vadd.f32 0.0, %v705
      %v707 = vpop.f32.mrb[0].mxu0
      %v708 = vpop.f32.mrb[0].mxu0
      %v709 = vadd.f32 0.0, %v708
      %v710 = vpop.f32.mrb[0].mxu0
      %711 = vmatprep.mubr.bf16.mxu0 0
      %712 = vmatmul.mubr.bf16.gmra.mrb[0].mxu0 %v515
      %v713 = vpop.f32.mrb[0].mxu0
      %v714 = vadd.f32 0.0, %v713
      %v715 = vpop.f32.mrb[0].mxu0
      %v716 = vpop.f32.mrb[0].mxu0
      %v717 = vadd.f32 0.0, %v716
      %v718 = vpop.f32.mrb[0].mxu0
      %719 = vmatprep.mubr.bf16.mxu0 0
      %720 = vmatmul.mubr.bf16.gmra.mrb[0].mxu0 %v516
      %v721 = vpop.f32.mrb[0].mxu0
      %v722 = vadd.f32 0.0, %v721
      %v723 = vpop.f32.mrb[0].mxu0
      %v724 = vpop.f32.mrb[0].mxu0
      %v725 = vadd.f32 0.0, %v724
      %v726 = vpop.f32.mrb[0].mxu0
      %727 = vmatprep.mubr.bf16.mxu0 0
      %728 = vmatmul.mubr.bf16.gmra.mrb[0].mxu0 %v517
      %v729 = vpop.f32.mrb[0].mxu0
      %v730 = vadd.f32 0.0, %v729
      %v731 = vpop.f32.mrb[0].mxu0
      %v732 = vpop.f32.mrb[0].mxu0
      %v733 = vadd.f32 0.0, %v732
      %v734 = vpop.f32.mrb[0].mxu0
      %735 = vmatprep.mubr.bf16.mxu0 0
      %736 = vmatmul.mubr.bf16.gmra.mrb[0].mxu0 %v518
      %v737 = vpop.f32.mrb[0].mxu0
      %v738 = vadd.f32 0.0, %v737
      %v739 = vpop.f32.mrb[0].mxu0
      %v740 = vpop.f32.mrb[0].mxu0
      %v741 = vadd.f32 0.0, %v740
      %v742 = vpop.f32.mrb[0].mxu0
      %743 = vdwg.mxu0
      %v744 = vadd.f32 %v359, %v618
      %v745 = vadd.f32 %v360, %v621
      %v746 = vadd.f32 %v361, %v626
      %v747 = vadd.f32 %v362, %v629
      %v748 = vadd.f32 %v363, %v634
      %v749 = vadd.f32 %v364, %v637
      %v750 = vadd.f32 %v365, %v642
      %v751 = vadd.f32 %v366, %v645
      %v752 = vadd.f32 %v367, %v650
      %v753 = vadd.f32 %v368, %v653
      %v754 = vadd.f32 %v369, %v658
      %v755 = vadd.f32 %v370, %v661
      %v756 = vadd.f32 %v371, %v666
      %v757 = vadd.f32 %v372, %v669
      %v758 = vadd.f32 %v373, %v674
      %v759 = vadd.f32 %v374, %v677
      %v760 = vadd.f32 %v375, %v682
      %v761 = vadd.f32 %v376, %v685
      %v762 = vadd.f32 %v377, %v690
      %v763 = vadd.f32 %v378, %v693
      %v764 = vadd.f32 %v379, %v698
      %v765 = vadd.f32 %v380, %v701
      %v766 = vadd.f32 %v381, %v706
      %v767 = vadd.f32 %v382, %v709
      %v768 = vadd.f32 %v383, %v714
      %v769 = vadd.f32 %v384, %v717
      %v770 = vadd.f32 %v385, %v722
      %v771 = vadd.f32 %v386, %v725
      %v772 = vadd.f32 %v387, %v730
      %v773 = vadd.f32 %v388, %v733
      %v774 = vadd.f32 %v389, %v738
      %v775 = vadd.f32 %v390, %v741
      %776 = vst [vmem:[#allocation2] sm:$0xff] %v744
      %777 = vst [vmem:[#allocation2 + $0x8] sm:$0xff] %v745
      %778 = vst [vmem:[#allocation2 + $0x10] sm:$0xff] %v746
      %779 = vst [vmem:[#allocation2 + $0x18] sm:$0xff] %v747
      %780 = vst [vmem:[#allocation2 + $0x20] sm:$0xff] %v748
      %781 = vst [vmem:[#allocation2 + $0x28] sm:$0xff] %v749
      %782 = vst [vmem:[#allocation2 + $0x30] sm:$0xff] %v750
      %783 = vst [vmem:[#allocation2 + $0x38] sm:$0xff] %v751
      %784 = vst [vmem:[#allocation2 + $0x40] sm:$0xff] %v752
      %785 = vst [vmem:[#allocation2 + $0x48] sm:$0xff] %v753
      %786 = vst [vmem:[#allocation2 + $0x50] sm:$0xff] %v754
      %787 = vst [vmem:[#allocation2 + $0x58] sm:$0xff] %v755
      %788 = vst [vmem:[#allocation2 + $0x60] sm:$0xff] %v756
      %789 = vst [vmem:[#allocation2 + $0x68] sm:$0xff] %v757
      %790 = vst [vmem:[#allocation2 + $0x70] sm:$0xff] %v758
      %791 = vst [vmem:[#allocation2 + $0x78] sm:$0xff] %v759
      %792 = vst [vmem:[#allocation2 + $0x80] sm:$0xff] %v760
      %793 = vst [vmem:[#allocation2 + $0x88] sm:$0xff] %v761
      %794 = vst [vmem:[#allocation2 + $0x90] sm:$0xff] %v762
      %795 = vst [vmem:[#allocation2 + $0x98] sm:$0xff] %v763
      %796 = vst [vmem:[#allocation2 + $0xa0] sm:$0xff] %v764
      %797 = vst [vmem:[#allocation2 + $0xa8] sm:$0xff] %v765
      %798 = vst [vmem:[#allocation2 + $0xb0] sm:$0xff] %v766
      %799 = vst [vmem:[#allocation2 + $0xb8] sm:$0xff] %v767
      %800 = vst [vmem:[#allocation2 + $0xc0] sm:$0xff] %v768
      %801 = vst [vmem:[#allocation2 + $0xc8] sm:$0xff] %v769
      %802 = vst [vmem:[#allocation2 + $0xd0] sm:$0xff] %v770
      %803 = vst [vmem:[#allocation2 + $0xd8] sm:$0xff] %v771
      %804 = vst [vmem:[#allocation2 + $0xe0] sm:$0xff] %v772
      %805 = vst [vmem:[#allocation2 + $0xe8] sm:$0xff] %v773
      %806 = vst [vmem:[#allocation2 + $0xf0] sm:$0xff] %v774
      %807 = vst [vmem:[#allocation2 + $0xf8] sm:$0xff] %v775
      // Predicated region
      $region37: #{matmul_bias.1} parent=31 // pred_check
        %p808 = pneg %p316
      $region38: #{matmul_bias.1} parent=31 // pred_check_branch
        %810 = sbr.rel (%p808) target = $region40
      $region39: #{matmul_bias.1} parent=31 // pred_region
        %v811 = vld [vmem:[#allocation2] sm:$0xff]
        %v812 = vld [vmem:[#allocation2 + $0x8] sm:$0xff]
        %v813 = vld [vmem:[#allocation2 + $0x10] sm:$0xff]
        %v814 = vld [vmem:[#allocation2 + $0x18] sm:$0xff]
        %v815 = vld [vmem:[#allocation2 + $0x20] sm:$0xff]
        %v816 = vld [vmem:[#allocation2 + $0x28] sm:$0xff]
        %v817 = vld [vmem:[#allocation2 + $0x30] sm:$0xff]
        %v818 = vld [vmem:[#allocation2 + $0x38] sm:$0xff]
        %v819 = vld [vmem:[#allocation2 + $0x40] sm:$0xff]
        %v820 = vld [vmem:[#allocation2 + $0x48] sm:$0xff]
        %v821 = vld [vmem:[#allocation2 + $0x50] sm:$0xff]
        %v822 = vld [vmem:[#allocation2 + $0x58] sm:$0xff]
        %v823 = vld [vmem:[#allocation2 + $0x60] sm:$0xff]
        %v824 = vld [vmem:[#allocation2 + $0x68] sm:$0xff]
        %v825 = vld [vmem:[#allocation2 + $0x70] sm:$0xff]
        %v826 = vld [vmem:[#allocation2 + $0x78] sm:$0xff]
        %v827 = vld [vmem:[#allocation2 + $0x80] sm:$0xff]
        %v828 = vld [vmem:[#allocation2 + $0x88] sm:$0xff]
        %v829 = vld [vmem:[#allocation2 + $0x90] sm:$0xff]
        %v830 = vld [vmem:[#allocation2 + $0x98] sm:$0xff]
        %v831 = vld [vmem:[#allocation2 + $0xa0] sm:$0xff]
        %v832 = vld [vmem:[#allocation2 + $0xa8] sm:$0xff]
        %v833 = vld [vmem:[#allocation2 + $0xb0] sm:$0xff]
        %v834 = vld [vmem:[#allocation2 + $0xb8] sm:$0xff]
        %v835 = vld [vmem:[#allocation2 + $0xc0] sm:$0xff]
        %v836 = vld [vmem:[#allocation2 + $0xc8] sm:$0xff]
        %v837 = vld [vmem:[#allocation2 + $0xd0] sm:$0xff]
        %v838 = vld [vmem:[#allocation2 + $0xd8] sm:$0xff]
        %v839 = vld [vmem:[#allocation2 + $0xe0] sm:$0xff]
        %v840 = vld [vmem:[#allocation2 + $0xe8] sm:$0xff]
        %v841 = vld [vmem:[#allocation2 + $0xf0] sm:$0xff]
        %v842 = vld [vmem:[#allocation2 + $0xf8] sm:$0xff]
        %843 = vst [vmem:[%s313] sm:$0xff] %v811
        %844 = vst [vmem:[%s313 + $0x8] sm:$0xff] %v812
        %845 = vst [vmem:[%s313 + $0x10] sm:$0xff] %v813
        %846 = vst [vmem:[%s313 + $0x18] sm:$0xff] %v814
        %847 = vst [vmem:[%s313 + $0x20] sm:$0xff] %v815
        %848 = vst [vmem:[%s313 + $0x28] sm:$0xff] %v816
        %849 = vst [vmem:[%s313 + $0x30] sm:$0xff] %v817
        %850 = vst [vmem:[%s313 + $0x38] sm:$0xff] %v818
        %851 = vst [vmem:[%s313 + $0x40] sm:$0xff] %v819
        %852 = vst [vmem:[%s313 + $0x48] sm:$0xff] %v820
        %853 = vst [vmem:[%s313 + $0x50] sm:$0xff] %v821
        %854 = vst [vmem:[%s313 + $0x58] sm:$0xff] %v822
        %855 = vst [vmem:[%s313 + $0x60] sm:$0xff] %v823
        %856 = vst [vmem:[%s313 + $0x68] sm:$0xff] %v824
        %857 = vst [vmem:[%s313 + $0x70] sm:$0xff] %v825
        %858 = vst [vmem:[%s313 + $0x78] sm:$0xff] %v826
        %859 = vst [vmem:[%s313 + $0x80] sm:$0xff] %v827
        %860 = vst [vmem:[%s313 + $0x88] sm:$0xff] %v828
        %861 = vst [vmem:[%s313 + $0x90] sm:$0xff] %v829
        %862 = vst [vmem:[%s313 + $0x98] sm:$0xff] %v830
        %863 = vst [vmem:[%s313 + $0xa0] sm:$0xff] %v831
        %864 = vst [vmem:[%s313 + $0xa8] sm:$0xff] %v832
        %865 = vst [vmem:[%s313 + $0xb0] sm:$0xff] %v833
        %866 = vst [vmem:[%s313 + $0xb8] sm:$0xff] %v834
        %867 = vst [vmem:[%s313 + $0xc0] sm:$0xff] %v835
        %868 = vst [vmem:[%s313 + $0xc8] sm:$0xff] %v836
        %869 = vst [vmem:[%s313 + $0xd0] sm:$0xff] %v837
        %870 = vst [vmem:[%s313 + $0xd8] sm:$0xff] %v838
        %871 = vst [vmem:[%s313 + $0xe0] sm:$0xff] %v839
        %872 = vst [vmem:[%s313 + $0xe8] sm:$0xff] %v840
        %873 = vst [vmem:[%s313 + $0xf0] sm:$0xff] %v841
        %874 = vst [vmem:[%s313 + $0xf8] sm:$0xff] %v842
      $region40: #{matmul_bias.1} parent=31 // pred_fallthru
        _
      %s875 = smul.u32 32, %s21
      %p876 = scmp.lt.s32.totalorder %s20, 0
      %s877 = scalar_select %p876, %s20, 0
      %p878 = scmp.lt.s32.totalorder %s875, 127
      %s879 = scalar_select %p878, %s875, 127
      %p880 = scmp.lt.s32.totalorder %s22, 0
      %s881 = scalar_select %p880, %s22, 0
      %s882 = sadd.s32 %s881, %s879
      %s883 = smul.addr %s877, 128
      %s884 = sadd.s32 %s882, %s883
      %s885 = smul.addr %s884, 8
      %s886 = scalar_lea.vmem %s3, %s885
      // Predicated region
      $region41: #{matmul_bias.1} parent=31 // pred_check
        %p887 = pneg %p150
      $region42: #{matmul_bias.1} parent=31 // pred_check_branch
        %889 = sbr.rel (%p887) target = $region44
      $region43: #{matmul_bias.1} parent=31 // pred_region
        %s890 = smul.u32 32, %s21
      $region44: #{matmul_bias.1} parent=31 // pred_fallthru
        _
    $region32: #{matmul_bias.1} parent=5 // pred_fallthru
      _
    %p891 = scmp.le.s32.totalorder 2, %s9
    // Predicated region
    $region45: #{matmul_bias.1} parent=5 // pred_check
      %p892 = pneg %p891
    $region46: #{matmul_bias.1} parent=5 // pred_check_branch
      %894 = sbr.rel (%p892) target = $region48
    $region47: #{matmul_bias.1} parent=5 // pred_region
      %s895 = ssub.s32 %s9, 2
      // Predicated region
      $region49: #{matmul_bias.1} parent=47 // pred_check
        %p896 = pneg %p156
      $region50: #{matmul_bias.1} parent=47 // pred_check_branch
        %898 = sbr.rel (%p896) target = $region52
      $region51: #{matmul_bias.1} parent=47 // pred_region
        %s899 = smul.u32 32, %s25
        %p900 = scmp.lt.s32.totalorder %s24, 0
        %s901 = scalar_select %p900, %s24, 0
        %p902 = scmp.lt.s32.totalorder %s899, 127
        %s903 = scalar_select %p902, %s899, 127
        %p904 = scmp.lt.s32.totalorder %s26, 0
        %s905 = scalar_select %p904, %s26, 0
        %s906 = sadd.s32 %s905, %s903
        %s907 = smul.addr %s901, 128
        %s908 = sadd.s32 %s906, %s907
        %s909 = smul.addr %s908, 8
        %s910 = scalar_lea.vmem %s3, %s909
      $region52: #{matmul_bias.1} parent=47 // pred_fallthru
        _
    $region48: #{matmul_bias.1} parent=5 // pred_fallthru
      _
  $region6: #{matmul_bias.1} parent=0 // loop_footer
    %s13 = sadd.s32 1, %s9
  $region7: #{matmul_bias.1} parent=0 // loop_footer_branch
    %8 = sbr.rel target = $region3
  $region8: #{matmul_bias.1} parent=0 // loop_exit
    _

</llo_original>
